<compile_context>
chip_gen: v5e
topology: v5e:2x2
jax: 0.10.0
libtpu: 0.0.40
codegen_flags: <defaults>
</compile_context>

<pallas_src>
import functools
import math

import jax
import jax.numpy as jnp
from jax import lax
from jax.experimental import pallas as pl
from jax.experimental.pallas import tpu as pltpu


def _round_up(x, m):
    return ((x + m - 1) // m) * m


# ---------------------------------------------------------------------------
# Stage 1: row-wise L2 normalization (F.normalize(dim=1)) of both embeddings.
# ---------------------------------------------------------------------------
def _normalize_kernel(emb_i_ref, emb_j_ref, zi_ref, zj_ref):
    eps = 1e-12
    ei = emb_i_ref[...].astype(jnp.float32)                           # (TB, D)
    ej = emb_j_ref[...].astype(jnp.float32)
    ni = jnp.maximum(jnp.sqrt(jnp.sum(ei * ei, axis=1, keepdims=True)), eps)
    nj = jnp.maximum(jnp.sqrt(jnp.sum(ej * ej, axis=1, keepdims=True)), eps)
    zi_ref[...] = ei / ni
    zj_ref[...] = ej / nj


# ---------------------------------------------------------------------------
# Stage 2: per-row-tile weighted NT-Xent partial loss (both "halves" per row).
# ---------------------------------------------------------------------------
def _wcl4_tile_kernel(zi_ref, zj_ref, out_ref, *, batch_size, padded_batch,
                      tile_rows, inv_temperature, matmul_dtype):
    r = pl.program_id(0)
    start = pl.multiple_of(r * tile_rows, tile_rows)
    n_pad = padded_batch - batch_size

    # current row tile (same row indices serve the "i" and "j" halves)
    zi_t = zi_ref[pl.ds(start, tile_rows), :]                         # (TB, D) f32
    zj_t = zj_ref[pl.ds(start, tile_rows), :]

    # positives & weights shared by rows [r] (first half) and [r+B] (second half)
    pos = jnp.sum(zi_t * zj_t, axis=1, keepdims=True)                 # (TB, 1)
    w = 1.0 - pos

    zi_all = zi_ref[...]                                              # (Bp, D)
    zj_all = zj_ref[...]

    dn = (((1,), (1,)), ((), ()))                                     # A @ B.T

    def mm(a, b):
        return lax.dot_general(a.astype(matmul_dtype), b.astype(matmul_dtype),
                               dn, preferred_element_type=jnp.float32)

    # four (TB, Bp) similarity blocks -> exp once each (EUP), reduce along lanes
    e_ii = jnp.exp(mm(zi_t, zi_all) * inv_temperature)
    e_ij = jnp.exp(mm(zi_t, zj_all) * inv_temperature)
    e_ji = jnp.exp(mm(zj_t, zi_all) * inv_temperature)
    e_jj = jnp.exp(mm(zj_t, zj_all) * inv_temperature)

    # self term exp(1/T) (unit-norm diag) + 2*n_pad padded zero-columns, each of
    # which contributes exp(0) == 1 exactly to one of the two half row-sums.
    correction = math.exp(inv_temperature) + 2.0 * n_pad

    den_i = (jnp.sum(e_ii, axis=1, keepdims=True)
             + jnp.sum(e_ij, axis=1, keepdims=True) - correction)     # (TB, 1)
    den_j = (jnp.sum(e_jj, axis=1, keepdims=True)
             + jnp.sum(e_ji, axis=1, keepdims=True) - correction)

    # padded query rows: pos == 0, w == 1 exactly; forcing den -> 1 makes their
    # contribution exactly zero (log(1) == 0), so no extra masking is needed.
    row_ids = start + lax.broadcasted_iota(jnp.int32, (tile_rows, 1), 0)
    valid = row_ids < batch_size
    den_i = jnp.where(valid, den_i, 1.0)
    den_j = jnp.where(valid, den_j, 1.0)

    # -log(exp(pos/T)/den) * w  ==  (log(den) - pos/T) * w ; both halves share pos/w.
    out_ref[...] = w * (jnp.log(den_i) + jnp.log(den_j)
                        - 2.0 * inv_temperature * pos)                # (TB, 1)


def weighted_contrastive_loss4(emb_i, emb_j, *, batch_size, temperature=0.5,
                               matmul_dtype=jnp.float32):
    """Forward pass of WeightedContrastiveLoss4. emb_i, emb_j: (B, D)."""
    assert emb_i.shape == emb_j.shape and emb_i.shape[0] == batch_size
    d = emb_i.shape[1]

    # Row tile: multiple of 8 (sublane), capped at 128.  Pad the batch so the
    # grid divides evenly; padded rows/columns are handled exactly in-kernel.
    tile_rows = min(128, _round_up(batch_size, 8))
    padded_batch = _round_up(batch_size, tile_rows)
    num_tiles = padded_batch // tile_rows

    if padded_batch != batch_size:
        pad = padded_batch - batch_size
        emb_i = jnp.pad(emb_i, ((0, pad), (0, 0)))
        emb_j = jnp.pad(emb_j, ((0, pad), (0, 0)))

    # --- stage 1: normalization (tiled, fully parallel) -----------------------
    row_spec = pl.BlockSpec((tile_rows, d), lambda r: (r, 0))
    zi, zj = pl.pallas_call(
        _normalize_kernel,
        out_shape=(jax.ShapeDtypeStruct((padded_batch, d), jnp.float32),
                   jax.ShapeDtypeStruct((padded_batch, d), jnp.float32)),
        grid=(num_tiles,),
        in_specs=[row_spec, row_spec],
        out_specs=(row_spec, row_spec),
        compiler_params=pltpu.CompilerParams(
            dimension_semantics=("parallel",)),
    )(emb_i, emb_j)

    # --- stage 2: tiled loss, one (TB, 1) partial block per grid step ---------
    kernel = functools.partial(
        _wcl4_tile_kernel,
        batch_size=batch_size,
        padded_batch=padded_batch,
        tile_rows=tile_rows,
        inv_temperature=1.0 / float(temperature),
        matmul_dtype=matmul_dtype,
    )
    partials = pl.pallas_call(
        kernel,
        out_shape=jax.ShapeDtypeStruct((padded_batch, 1), jnp.float32),
        grid=(num_tiles,),
        in_specs=[
            # Full (padded) normalized embeddings resident in VMEM (constant block
            # index -> DMA'd once per core); O(B*D), never O(B^2).
            pl.BlockSpec((padded_batch, d), lambda r: (0, 0)),
            pl.BlockSpec((padded_batch, d), lambda r: (0, 0)),
        ],
        out_specs=pl.BlockSpec((tile_rows, 1), lambda r: (r, 0)),
        compiler_params=pltpu.CompilerParams(
            dimension_semantics=("parallel",)),
    )(zi, zj)

    # Tiny O(B) final reduction (padded rows contribute exactly 0).
    return jnp.sum(partials) * (0.5 / batch_size)


def _reference(emb_i, emb_j, batch_size, temperature=0.5):
    """Pure-JAX reference mirroring the PyTorch module (for the self-check)."""
    eps = 1e-12
    z_i = emb_i / jnp.maximum(jnp.linalg.norm(emb_i, axis=1, keepdims=True), eps)
    z_j = emb_j / jnp.maximum(jnp.linalg.norm(emb_j, axis=1, keepdims=True), eps)
    reps = jnp.concatenate([z_i, z_j], axis=0)
    sim = reps @ reps.T
    sim_ij = jnp.diagonal(sim, offset=batch_size)
    sim_ji = jnp.diagonal(sim, offset=-batch_size)
    positives = jnp.concatenate([sim_ij, sim_ji])
    w = 1.0 - jnp.sum(z_i * z_j, axis=1)
    weights = jnp.concatenate([w, w])
    nominator = jnp.exp(positives / temperature)
    neg_mask = 1.0 - jnp.eye(2 * batch_size)
    denominator = jnp.sum(neg_mask * jnp.exp(sim / temperature), axis=1)
    loss_partial = -jnp.log(nominator / denominator) * weights
    return jnp.sum(loss_partial) / (2 * batch_size)


if __name__ == "__main__":
    temperature = 0.5
    key = jax.random.PRNGKey(0)

    # --- small demo shape (matches the module's expected (B, D) inputs) --------
    B, D = 4, 32
    k1, k2, k3, k4 = jax.random.split(key, 4)
    emb_i = jax.random.normal(k1, (B, D), dtype=jnp.float32)
    emb_j = jax.random.normal(k2, (B, D), dtype=jnp.float32)

    loss = weighted_contrastive_loss4(
        emb_i, emb_j, batch_size=B, temperature=temperature)
    jax.block_until_ready(loss)
    ref = _reference(emb_i, emb_j, B, temperature)
    assert jnp.allclose(loss, ref, rtol=1e-5, atol=1e-5), (loss, ref)

    # --- larger shape: exercises multi-tile parallel grid + row/col padding ----
    B2, D2 = 200, 64
    emb_i2 = jax.random.normal(k3, (B2, D2), dtype=jnp.float32)
    emb_j2 = jax.random.normal(k4, (B2, D2), dtype=jnp.float32)
    loss2 = weighted_contrastive_loss4(
        emb_i2, emb_j2, batch_size=B2, temperature=temperature)
    jax.block_until_ready(loss2)
    ref2 = _reference(emb_i2, emb_j2, B2, temperature)
    assert jnp.allclose(loss2, ref2, rtol=5e-5, atol=5e-5), (loss2, ref2)

    # --- bf16 MXU operands (f32 accumulate): looser tolerance ------------------
    loss_bf16 = weighted_contrastive_loss4(
        emb_i2, emb_j2, batch_size=B2, temperature=temperature,
        matmul_dtype=jnp.bfloat16)
    jax.block_until_ready(loss_bf16)
    assert jnp.allclose(loss_bf16, ref2, rtol=2e-2, atol=2e-2), (loss_bf16, ref2)

    print("KERNEL_OK")
</pallas_src>

<mosaic_0001>
module attributes {stable_mosaic.version = 11 : i64} {
  func.func @_normalize_kernel(%arg0: i32, %arg1: memref<8x32xf32, #tpu.memory_space<vmem>>, %arg2: memref<8x32xf32, #tpu.memory_space<vmem>>, %arg3: memref<8x32xf32, #tpu.memory_space<vmem>>, %arg4: memref<8x32xf32, #tpu.memory_space<vmem>>) attributes {dimension_semantics = [#tpu.dimension_semantics<parallel>], iteration_bounds = array<i64: 1>, scalar_prefetch = 0 : i64, scratch_operands = 0 : i64, tpu.core_type = #tpu.core_type<tc>, window_params = [{transform_indices = @transform_0, window_bounds = array<i64: 8, 32>}, {transform_indices = @transform_1, window_bounds = array<i64: 8, 32>}, {transform_indices = @transform_2, window_bounds = array<i64: 8, 32>}, {transform_indices = @transform_3, window_bounds = array<i64: 8, 32>}]} {
    %c0 = arith.constant 0 : index
    %c0_0 = arith.constant 0 : index
    %0 = vector.load %arg1[%c0, %c0_0] : memref<8x32xf32, #tpu.memory_space<vmem>>, vector<8x32xf32>
    %c0_1 = arith.constant 0 : index
    %c0_2 = arith.constant 0 : index
    %1 = vector.load %arg2[%c0_1, %c0_2] : memref<8x32xf32, #tpu.memory_space<vmem>>, vector<8x32xf32>
    %2 = arith.mulf %0, %0 : vector<8x32xf32>
    %cst = arith.constant dense<0.000000e+00> : vector<8xf32>
    %3 = vector.multi_reduction <add>, %2, %cst [1] : vector<8x32xf32> to vector<8xf32>
    %4 = vector.shape_cast %3 : vector<8xf32> to vector<8x1xf32>
    %5 = math.sqrt %4 : vector<8x1xf32>
    %cst_3 = arith.constant 9.99999996E-13 : f32
    %6 = vector.broadcast %cst_3 : f32 to vector<8x1xf32>
    %7 = arith.maximumf %5, %6 : vector<8x1xf32>
    %8 = arith.mulf %1, %1 : vector<8x32xf32>
    %cst_4 = arith.constant dense<0.000000e+00> : vector<8xf32>
    %9 = vector.multi_reduction <add>, %8, %cst_4 [1] : vector<8x32xf32> to vector<8xf32>
    %10 = vector.shape_cast %9 : vector<8xf32> to vector<8x1xf32>
    %11 = math.sqrt %10 : vector<8x1xf32>
    %cst_5 = arith.constant 9.99999996E-13 : f32
    %12 = vector.broadcast %cst_5 : f32 to vector<8x1xf32>
    %13 = arith.maximumf %11, %12 : vector<8x1xf32>
    %14 = vector.broadcast %7 : vector<8x1xf32> to vector<8x32xf32>
    %15 = arith.divf %0, %14 : vector<8x32xf32>
    %c0_6 = arith.constant 0 : index
    %c0_7 = arith.constant 0 : index
    %16 = vector.load %arg3[%c0_6, %c0_7] : memref<8x32xf32, #tpu.memory_space<vmem>>, vector<8x32xf32>
    tpu.vector_store %arg3[%c0_6, %c0_7], %15 {strides = array<i32>} : memref<8x32xf32, #tpu.memory_space<vmem>>, vector<8x32xf32>,
    %17 = vector.broadcast %13 : vector<8x1xf32> to vector<8x32xf32>
    %18 = arith.divf %1, %17 : vector<8x32xf32>
    %c0_8 = arith.constant 0 : index
    %c0_9 = arith.constant 0 : index
    %19 = vector.load %arg4[%c0_8, %c0_9] : memref<8x32xf32, #tpu.memory_space<vmem>>, vector<8x32xf32>
    tpu.vector_store %arg4[%c0_8, %c0_9], %18 {strides = array<i32>} : memref<8x32xf32, #tpu.memory_space<vmem>>, vector<8x32xf32>,
    return
  }
  func.func @transform_0(%arg0: i32) -> (i32, i32) {
    %c0_i32 = arith.constant 0 : i32
    %c0_i32_0 = arith.constant 0 : i32
    return %arg0, %c0_i32 : i32, i32
  }
  func.func @transform_1(%arg0: i32) -> (i32, i32) {
    %c0_i32 = arith.constant 0 : i32
    %c0_i32_0 = arith.constant 0 : i32
    return %arg0, %c0_i32 : i32, i32
  }
  func.func @transform_2(%arg0: i32) -> (i32, i32) {
    %c0_i32 = arith.constant 0 : i32
    %c0_i32_0 = arith.constant 0 : i32
    return %arg0, %c0_i32 : i32, i32
  }
  func.func @transform_3(%arg0: i32) -> (i32, i32) {
    %c0_i32 = arith.constant 0 : i32
    %c0_i32_0 = arith.constant 0 : i32
    return %arg0, %c0_i32 : i32, i32
  }
}

</mosaic_0001>

<llo_original>
// kernel: tpu_custom_call.1
$region0: #{tpu_custom_call.1}
  #allocation0 [shape = 'u32[]', space=smem, size = 0x4, offset = 0x4, fixed_abs, tag = 'smem constant byte address 0x4 - core index']
  #allocation1 [shape = 'u32[72,128]{1,0:T(1,128)}', space=vmem, size = 0x9000, scoped, tag = 'internal scratch']
  %s0 = inlined_call_operand.hbm [shape: f32[8,32], index: 0, kind: input, shape index: {}]
  %s1 = inlined_call_operand.hbm [shape: f32[8,32], index: 1, kind: input, shape index: {}]
  %s2 = inlined_call_operand.hbm [shape: f32[8,32], index: 2, kind: output, shape index: {0}]
  %s3 = inlined_call_operand.hbm [shape: f32[8,32], index: 3, kind: output, shape index: {1}]
  %4 = xla_tuple %s2, %s3
  %s5 = sld [smem:[#allocation0]]
  $region34: #{tpu_custom_call.1} parent=0
    _
  %s7 = ssub.s32 1, %s5
  %s8 = scalar_select 0, %s7, %s5
  $region1: #{tpu_custom_call.1} parent=0
    #allocation2 [shape = 'u8[4096]{0}', space=vmem, size = 0x1000, scoped, tag = 'input window, operand 0, single buffered']
    #allocation3 [shape = 's32[1]{0}', space=sflag, size = 0x4, scoped, tag = 'scoped memory for tpu_custom_call.1']
    #allocation4 [shape = 's32[1]{0}', space=sflag, size = 0x4, scoped, tag = 'scoped memory for tpu_custom_call.1']
    #allocation5 [shape = 'u8[4096]{0}', space=vmem, size = 0x1000, scoped, tag = 'input window, operand 1, single buffered']
    #allocation6 [shape = 's32[1]{0}', space=sflag, size = 0x4, scoped, tag = 'scoped memory for tpu_custom_call.1']
    #allocation7 [shape = 'u8[4096]{0}', space=vmem, size = 0x1000, scoped, tag = 'output window, operand 0, single buffered']
    #allocation8 [shape = 'u8[4096]{0}', space=vmem, size = 0x1000, scoped, tag = 'output window, operand 1, single buffered']
    #allocation9 [shape = 's32[1]{0}', space=sflag, size = 0x4, scoped, tag = 'scoped memory for tpu_custom_call.1']
    %9 = vsyncpa [#allocation3], 0
    %10 = vsyncpa [#allocation6], 0
    %11 = vsyncpa [#allocation4], 0
    %12 = vsyncpa [#allocation9], 0
    // Predicated region
    $region2: #{tpu_custom_call.1} parent=1 // pred_check
      _
    $region3: #{tpu_custom_call.1} parent=1 // pred_check_branch
      %14 = sbr.rel (0) target = $region5
    $region4: #{tpu_custom_call.1} parent=1 // pred_region
      %16 = vsyncadd [#allocation3], 0
      %s18 = sshll.u32 %s0, 4
      %s19 = int_to_ptr.hbm [resolvable:$true] %s18
      %s20 = sshll.u32 [#allocation2], 4
      %s21 = int_to_ptr.vmem [resolvable:$true] %s20
      %23 = dma.hbm_to_vmem [thread:$0]  %s19, 128, %s21, [#allocation3]
    $region5: #{tpu_custom_call.1} parent=1 // pred_fallthru
      _
    // Predicated region
    $region6: #{tpu_custom_call.1} parent=1 // pred_check
      _
    $region7: #{tpu_custom_call.1} parent=1 // pred_check_branch
      %25 = sbr.rel (0) target = $region9
    $region8: #{tpu_custom_call.1} parent=1 // pred_region
      %27 = vsyncadd [#allocation6], 0
      %s29 = sshll.u32 %s1, 4
      %s30 = int_to_ptr.hbm [resolvable:$true] %s29
      %s31 = sshll.u32 [#allocation5], 4
      %s32 = int_to_ptr.vmem [resolvable:$true] %s31
      %34 = dma.hbm_to_vmem [thread:$0]  %s30, 128, %s32, [#allocation6]
    $region9: #{tpu_custom_call.1} parent=1 // pred_fallthru
      _
    // Predicated region
    $region10: #{tpu_custom_call.1} parent=1 // pred_check
      _
    $region11: #{tpu_custom_call.1} parent=1 // pred_check_branch
      %36 = sbr.rel (0) target = $region13
    $region12: #{tpu_custom_call.1} parent=1 // pred_region
      %38 = dma.done [#allocation3], 128
    $region13: #{tpu_custom_call.1} parent=1 // pred_fallthru
      _
    // Predicated region
    $region14: #{tpu_custom_call.1} parent=1 // pred_check
      _
    $region15: #{tpu_custom_call.1} parent=1 // pred_check_branch
      %40 = sbr.rel (0) target = $region17
    $region16: #{tpu_custom_call.1} parent=1 // pred_region
      %42 = dma.done [#allocation6], 128
    $region17: #{tpu_custom_call.1} parent=1 // pred_fallthru
      _
    %v43 = vld [vmem:[#allocation2] sm:$0xff]
    %v44 = vld [vmem:[#allocation5] sm:$0xff]
    %v45 = vmul.f32 %v43, %v43
    %vm46 = vcmask 261120
    %v47 = vsel %vm46, %v45, 0.0
    %48 = vadd.xlane.f32.xlu0 %v47
    %v49 = vpop.xlane.xlu0 %48
    %v50 = vrsqrt.pop %v49
    %v51 = vmul.f32 %v50, %v49
    %v52 = vmul.f32 %v51, %v50
    %v53 = vmul.f32 0.5, %v52
    %v54 = vsub.f32 1.5, %v53
    %v55 = vmul.f32 %v50, %v54
    %v56 = vmul.f32 %v49, %v55
    %vm57 = vcmp.eq.f32.partialorder %v49, inf
    %v58 = vsel %vm57, %v49, %v56
    %vm59 = vcmp.eq.f32.partialorder %v49, 0.0
    %v60 = vand.u32 %v49, 2147483648
    %v61 = vsel %vm59, %v60, %v58
    %v62 = vmax.f32 %v61, 1e-12
    %v63 = vmul.f32 %v44, %v44
    %v64 = vsel %vm46, %v63, 0.0
    %65 = vadd.xlane.f32.xlu0 %v64
    %v66 = vpop.xlane.xlu0 %65
    %v67 = vrsqrt.pop %v66
    %v68 = vmul.f32 %v67, %v66
    %v69 = vmul.f32 %v68, %v67
    %v70 = vmul.f32 0.5, %v69
    %v71 = vsub.f32 1.5, %v70
    %v72 = vmul.f32 %v67, %v71
    %v73 = vmul.f32 %v66, %v72
    %vm74 = vcmp.eq.f32.partialorder %v66, inf
    %v75 = vsel %vm74, %v66, %v73
    %vm76 = vcmp.eq.f32.partialorder %v66, 0.0
    %v77 = vand.u32 %v66, 2147483648
    %v78 = vsel %vm76, %v77, %v75
    %v79 = vmax.f32 %v78, 1e-12
    %v80 = vrcp.pop %v62
    %v81 = vmul.f32 %v62, %v80
    %v82 = vsub.f32 1.0, %v81
    %v83 = vmul.f32 %v80, %v82
    %v84 = vadd.f32 %v80, %v83
    %vm85 = vweird.f32 %v62
    %vm86 = vweird.f32 %v80
    %vm87 = vmor %vm85, %vm86
    %v88 = vsel %vm87, %v80, %v84
    %v89 = vand.u32 2147483647, %v62
    %vm90 = vcmp.eq.f32.partialorder %v89, 8.507059e+37
    %v91 = vand.u32 %v62, 2147483648
    %v92 = vor.u32 1.1754944e-38, %v91
    %v93 = vsel %vm90, %v92, %v88
    %v94 = vmul.f32 %v43, %v93
    %95 = vst.msk [vmem:[#allocation7] sm:$0xff] %vm46, %v94
    %v96 = vrcp.pop %v79
    %v97 = vmul.f32 %v79, %v96
    %v98 = vsub.f32 1.0, %v97
    %v99 = vmul.f32 %v96, %v98
    %v100 = vadd.f32 %v96, %v99
    %vm101 = vweird.f32 %v79
    %vm102 = vweird.f32 %v96
    %vm103 = vmor %vm101, %vm102
    %v104 = vsel %vm103, %v96, %v100
    %v105 = vand.u32 2147483647, %v79
    %vm106 = vcmp.eq.f32.partialorder %v105, 8.507059e+37
    %v107 = vand.u32 %v79, 2147483648
    %v108 = vor.u32 1.1754944e-38, %v107
    %v109 = vsel %vm106, %v108, %v104
    %v110 = vmul.f32 %v44, %v109
    %111 = vst.msk [vmem:[#allocation8] sm:$0xff] %vm46, %v110
    // Predicated region
    $region18: #{tpu_custom_call.1} parent=1 // pred_check
      _
    $region19: #{tpu_custom_call.1} parent=1 // pred_check_branch
      %113 = sbr.rel (0) target = $region21
    $region20: #{tpu_custom_call.1} parent=1 // pred_region
      %115 = vsyncadd [#allocation4], 0
      %s117 = sshll.u32 [#allocation7], 4
      %s118 = int_to_ptr.vmem [resolvable:$true] %s117
      %s119 = sshll.u32 %s2, 4
      %s120 = int_to_ptr.hbm [resolvable:$true] %s119
      %122 = dma.vmem_to_hbm [thread:$0]  %s118, 128, %s120, [#allocation4]
    $region21: #{tpu_custom_call.1} parent=1 // pred_fallthru
      _
    // Predicated region
    $region22: #{tpu_custom_call.1} parent=1 // pred_check
      _
    $region23: #{tpu_custom_call.1} parent=1 // pred_check_branch
      %124 = sbr.rel (0) target = $region25
    $region24: #{tpu_custom_call.1} parent=1 // pred_region
      %126 = vsyncadd [#allocation9], 0
      %s128 = sshll.u32 [#allocation8], 4
      %s129 = int_to_ptr.vmem [resolvable:$true] %s128
      %s130 = sshll.u32 %s3, 4
      %s131 = int_to_ptr.hbm [resolvable:$true] %s130
      %133 = dma.vmem_to_hbm [thread:$0]  %s129, 128, %s131, [#allocation9]
    $region25: #{tpu_custom_call.1} parent=1 // pred_fallthru
      _
    // Predicated region
    $region26: #{tpu_custom_call.1} parent=1 // pred_check
      _
    $region27: #{tpu_custom_call.1} parent=1 // pred_check_branch
      %135 = sbr.rel (0) target = $region29
    $region28: #{tpu_custom_call.1} parent=1 // pred_region
      %137 = dma.done [#allocation4], 128
    $region29: #{tpu_custom_call.1} parent=1 // pred_fallthru
      _
    // Predicated region
    $region30: #{tpu_custom_call.1} parent=1 // pred_check
      _
    $region31: #{tpu_custom_call.1} parent=1 // pred_check_branch
      %139 = sbr.rel (0) target = $region33
    $region32: #{tpu_custom_call.1} parent=1 // pred_region
      %141 = dma.done [#allocation9], 128
    $region33: #{tpu_custom_call.1} parent=1 // pred_fallthru
      _
    %142 = vsyncpa [#allocation3], 1
    %143 = vsyncpa [#allocation6], 1
    %144 = vsyncpa [#allocation4], 1
    %145 = vsyncpa [#allocation9], 1

</llo_original>
